<compile_context>
chip_gen: v5e
topology: v5e:2x2
jax: 0.10.0
libtpu: 0.0.40
codegen_flags: <defaults>
</compile_context>

<pallas_src>
import functools

import jax
import jax.numpy as jnp
from jax.experimental import pallas as pl
from jax.experimental.pallas import tpu as pltpu


def _top1_loss_kernel(x_ref, hdiag_ref, out_ref, acc_ref, *,
                      tile_m, acc_rows, steps_per_split, scale, compute_dtype):
    j = pl.program_id(1)  # row-tile step within this split

    @pl.when(j == 0)
    def _init():
        acc_ref[...] = jnp.zeros_like(acc_ref)

    x = x_ref[...].astype(compute_dtype)  # (tile_m, n)

    # 0.5 * diag rows for this tile; the (n, 1) diagonal stays resident in VMEM.
    if tile_m == hdiag_ref.shape[0]:
        hd = hdiag_ref[...]                                       # single full block
    else:
        row0 = (pl.program_id(0) * steps_per_split + j) * tile_m
        if tile_m >= 8 and (tile_m & (tile_m - 1)) == 0:
            row0 = pl.multiple_of(row0, tile_m)
        hd = hdiag_ref[pl.ds(row0, tile_m), :]                    # (tile_m, 1)

    # sigmoid(a) + sigmoid(b) == 0.5*(tanh(a/2) + tanh(b/2)) + 1; the 0.5 and the +1
    # are folded into finalize / the wrapper.  h = x/2 is reused for both arguments.
    h = x * 0.5
    t = jnp.tanh(h - hd) + jnp.tanh(h * x)

    # Fold into the vreg-shaped f32 accumulator with pure element-wise adds (VALU);
    # the single cross-lane reduce happens once at finalize.
    folded = t.astype(jnp.float32).reshape(tile_m // acc_rows, acc_rows, -1)
    acc_ref[...] += jnp.sum(folded, axis=0)

    @pl.when(j == steps_per_split - 1)
    def _finalize():
        total = jnp.sum(acc_ref[...], keepdims=True)              # (1, 1): one XLU reduce
        out_ref[...] = (total * scale).reshape(1, 1, 1)


_CANDIDATE_TILES = (1024, 512, 256, 128, 64, 32, 16, 8)


def _vmem_capacity_bytes():
    try:
        return int(pltpu.get_tpu_info().vmem_capacity_bytes)
    except Exception:
        return 64 * 1024 * 1024  # conservative (v7x-sized) fallback


def _estimate_vmem(tile_m, n, in_itemsize, comp_itemsize):
    n_pad8 = -(-n // 8) * 8
    n_pad128 = -(-n // 128) * 128
    acc_rows = 8 if tile_m % 8 == 0 else tile_m
    acc_rows_pad = -(-acc_rows // 8) * 8
    return (2 * tile_m * n_pad128 * in_itemsize      # double-buffered input block
            + 2 * tile_m * n_pad128 * 4              # headroom for f32 temporaries
            + 2 * n_pad8 * 128 * comp_itemsize       # resident 0.5*diag (lane-padded)
            + acc_rows_pad * n_pad128 * 4            # (acc_rows, n) f32 accumulator
            + (1 << 20))                             # misc / internal scratch


def _pick_tiling(n, in_itemsize, comp_itemsize, usable):
    min_rows = 8 if in_itemsize >= 4 else 16         # packed dtypes need >=16 sublanes
    for t in _CANDIDATE_TILES:
        if t < min_rows or t >= n or n % t != 0:
            continue
        if _estimate_vmem(t, n, in_itemsize, comp_itemsize) <= usable:
            return t
    if _estimate_vmem(n, n, in_itemsize, comp_itemsize) <= usable:
        return n                                     # single full-matrix block
    return None


def top1_loss(logit, *, tile_m=None):
    """logit: (N, N) float array. Returns the scalar TOP1 loss (float32)."""
    n = logit.shape[0]
    assert logit.shape == (n, n), "TOP1Loss expects a square logit matrix"
    in_itemsize = jnp.dtype(logit.dtype).itemsize

    # bf16 logits stay bf16 through the transcendentals (bf16 EUP on v6e/v7x);
    # everything else computes in f32.  Accumulation is always f32.
    compute_dtype = jnp.bfloat16 if logit.dtype == jnp.bfloat16 else jnp.float32
    comp_itemsize = jnp.dtype(compute_dtype).itemsize

    vmem_cap = _vmem_capacity_bytes()
    usable = int(vmem_cap * 0.85)

    if tile_m is None:
        tile_m = _pick_tiling(n, in_itemsize, comp_itemsize, usable)
        if tile_m is None:
            # Irregular / gigantic N: plain JAX fallback (XLA fuses this fine).
            return top1_loss_ref(logit)
    assert 0 < tile_m <= n and n % tile_m == 0

    n_tiles = n // tile_m
    # Outer "parallel" grid axis: splits row tiles across TensorCores (2 on v7x).
    num_splits = 2 if (n_tiles >= 2 and n_tiles % 2 == 0) else 1
    steps_per_split = n_tiles // num_splits
    acc_rows = 8 if tile_m % 8 == 0 else tile_m

    # Resident, pre-scaled diagonal: DMA'd once (constant index_map), sliced in-kernel.
    half_diag = (jnp.diagonal(logit).astype(jnp.float32) * 0.5).astype(compute_dtype)
    half_diag = half_diag.reshape(n, 1)

    kernel = functools.partial(
        _top1_loss_kernel,
        tile_m=tile_m, acc_rows=acc_rows, steps_per_split=steps_per_split,
        scale=0.5 / float(n * n), compute_dtype=compute_dtype)

    partials = pl.pallas_call(
        kernel,
        out_shape=jax.ShapeDtypeStruct((num_splits, 1, 1), jnp.float32),
        grid_spec=pltpu.PrefetchScalarGridSpec(
            num_scalar_prefetch=0,
            grid=(num_splits, steps_per_split),
            in_specs=[
                pl.BlockSpec((tile_m, n),
                             lambda i, j: (i * steps_per_split + j, 0)),
                pl.BlockSpec((n, 1), lambda i, j: (0, 0)),   # resident diagonal
            ],
            out_specs=pl.BlockSpec((1, 1, 1), lambda i, j: (i, 0, 0)),
            scratch_shapes=[pltpu.VMEM((acc_rows, n), jnp.float32)],
        ),
        compiler_params=pltpu.CompilerParams(
            dimension_semantics=("parallel", "arbitrary"),
            vmem_limit_bytes=usable,
        ),
        cost_estimate=pl.CostEstimate(
            flops=5 * n * n,
            transcendentals=2 * n * n,
            bytes_accessed=n * n * in_itemsize + n * comp_itemsize + 4 * num_splits,
        ),
    )(logit, half_diag)

    # The per-element "+1" (mean of the constant term is exactly 1) is added once here,
    # together with the per-core partial sums.
    return jnp.sum(partials) + jnp.float32(1.0)


def top1_loss_ref(logit):
    x = logit.astype(jnp.float32)
    diag = jnp.diagonal(x).reshape(-1, 1)
    diff = x - diag
    return jnp.mean(jax.nn.sigmoid(diff)) + jnp.mean(jax.nn.sigmoid(x * x))


if __name__ == "__main__":
    key = jax.random.PRNGKey(0)
    k_big, k_small = jax.random.split(key)

    # Multi-step + 2-split grid path: N=256, tile_m=64 -> grid (2, 2) with accumulator.
    n = 256
    logit = jax.random.normal(k_big, (n, n), dtype=jnp.float32)
    loss = top1_loss(logit, tile_m=64)
    jax.block_until_ready(loss)
    ref = top1_loss_ref(logit)
    assert jnp.allclose(loss, ref, atol=1e-4, rtol=1e-4), (loss, ref)

    # Auto-tiled path (tile size / VMEM budget derived from the chip's capacity).
    loss_auto = top1_loss(logit)
    jax.block_until_ready(loss_auto)
    assert jnp.allclose(loss_auto, ref, atol=1e-4, rtol=1e-4), (loss_auto, ref)

    # bf16 logits: bf16 stays through the tanh (EUP win on v6e/v7x); looser tolerance.
    logit_bf16 = logit.astype(jnp.bfloat16)
    loss_bf16 = top1_loss(logit_bf16, tile_m=64)
    jax.block_until_ready(loss_bf16)
    ref_bf16 = top1_loss_ref(logit_bf16)
    assert jnp.allclose(loss_bf16, ref_bf16, atol=5e-3, rtol=5e-3), (loss_bf16, ref_bf16)

    # Tiny single-block path (matches the original module's toy batch size).
    logit_small = jax.random.normal(k_small, (8, 8), dtype=jnp.float32)
    loss_small = top1_loss(logit_small)
    jax.block_until_ready(loss_small)
    ref_small = top1_loss_ref(logit_small)
    assert jnp.allclose(loss_small, ref_small, atol=1e-4, rtol=1e-4), (loss_small, ref_small)

    print("KERNEL_OK")
</pallas_src>

<mosaic_0001>
module attributes {stable_mosaic.version = 11 : i64} {
  func.func @_top1_loss_kernel(%arg0: i32, %arg1: i32, %arg2: memref<64x256xf32, #tpu.memory_space<vmem>>, %arg3: memref<256x1xf32, #tpu.memory_space<vmem>>, %arg4: memref<1x1x1xf32, #tpu.memory_space<vmem>>, %arg5: memref<8x256xf32, #tpu.memory_space<vmem>>) attributes {dimension_semantics = [#tpu.dimension_semantics<parallel>, #tpu.dimension_semantics<arbitrary>], iteration_bounds = array<i64: 2, 2>, scalar_prefetch = 0 : i64, scratch_operands = 1 : i64, tpu.core_type = #tpu.core_type<tc>, window_params = [{transform_indices = @transform_0, window_bounds = array<i64: 64, 256>}, {pipeline_mode = #tpu.pipeline_mode<synchronous>, transform_indices = @transform_1, window_bounds = array<i64: 256, 1>}, {transform_indices = @transform_2, window_bounds = array<i64: 1, 1, 1>}]} {
    %c0_i32 = arith.constant 0 : i32
    %0 = arith.cmpi eq, %arg1, %c0_i32 : i32
    %1 = arith.extui %0 : i1 to i32
    %c0_i32_0 = arith.constant 0 : i32
    %2 = arith.cmpi ne, %1, %c0_i32_0 : i32
    scf.if %2 {
      %cst_9 = arith.constant 0.000000e+00 : f32
      %26 = vector.broadcast %cst_9 : f32 to vector<8x256xf32>
      %c0_10 = arith.constant 0 : index
      %c0_11 = arith.constant 0 : index
      %27 = vector.load %arg5[%c0_10, %c0_11] : memref<8x256xf32, #tpu.memory_space<vmem>>, vector<8x256xf32>
      tpu.vector_store %arg5[%c0_10, %c0_11], %26 {strides = array<i32>} : memref<8x256xf32, #tpu.memory_space<vmem>>, vector<8x256xf32>,
    } else {
    }
    %c0 = arith.constant 0 : index
    %c0_1 = arith.constant 0 : index
    %3 = vector.load %arg2[%c0, %c0_1] : memref<64x256xf32, #tpu.memory_space<vmem>>, vector<64x256xf32>
    %c2_i32 = arith.constant 2 : i32
    %4 = arith.muli %arg0, %c2_i32 : i32
    %5 = arith.addi %4, %arg1 : i32
    %c64_i32 = arith.constant 64 : i32
    %6 = arith.muli %5, %c64_i32 : i32
    %7 = tpu.assume_multiple %6, 64 : i32
    %8 = arith.index_cast %7 : i32 to index
    %c0_2 = arith.constant 0 : index
    %9 = vector.load %arg3[%8, %c0_2] : memref<256x1xf32, #tpu.memory_space<vmem>>, vector<64x1xf32>
    %cst = arith.constant 5.000000e-01 : f32
    %10 = vector.broadcast %cst : f32 to vector<64x256xf32>
    %11 = arith.mulf %3, %10 : vector<64x256xf32>
    %12 = vector.broadcast %9 : vector<64x1xf32> to vector<64x256xf32>
    %13 = arith.subf %11, %12 : vector<64x256xf32>
    %14 = math.tanh %13 : vector<64x256xf32>
    %15 = arith.mulf %11, %3 : vector<64x256xf32>
    %16 = math.tanh %15 : vector<64x256xf32>
    %17 = arith.addf %14, %16 : vector<64x256xf32>
    %18 = vector.shape_cast %17 : vector<64x256xf32> to vector<8x8x256xf32>
    %c0_3 = arith.constant 0 : index
    %c0_4 = arith.constant 0 : index
    %19 = vector.load %arg5[%c0_3, %c0_4] : memref<8x256xf32, #tpu.memory_space<vmem>>, vector<8x256xf32>
    %cst_5 = arith.constant dense<0.000000e+00> : vector<8x256xf32>
    %20 = vector.multi_reduction <add>, %18, %cst_5 [0] : vector<8x8x256xf32> to vector<8x256xf32>
    %21 = arith.addf %19, %20 : vector<8x256xf32>
    %c0_6 = arith.constant 0 : index
    %c0_7 = arith.constant 0 : index
    %22 = vector.load %arg5[%c0_6, %c0_7] : memref<8x256xf32, #tpu.memory_space<vmem>>, vector<8x256xf32>
    tpu.vector_store %arg5[%c0_6, %c0_7], %21 {strides = array<i32>} : memref<8x256xf32, #tpu.memory_space<vmem>>, vector<8x256xf32>,
    %c1_i32 = arith.constant 1 : i32
    %23 = arith.cmpi eq, %arg1, %c1_i32 : i32
    %24 = arith.extui %23 : i1 to i32
    %c0_i32_8 = arith.constant 0 : i32
    %25 = arith.cmpi ne, %24, %c0_i32_8 : i32
    scf.if %25 {
      %c0_9 = arith.constant 0 : index
      %c0_10 = arith.constant 0 : index
      %26 = vector.load %arg5[%c0_9, %c0_10] : memref<8x256xf32, #tpu.memory_space<vmem>>, vector<8x256xf32>
      %27 = vector.shape_cast %26 : vector<8x256xf32> to vector<1x8x256xf32>
      %cst_11 = arith.constant dense<0.000000e+00> : vector<1xf32>
      %28 = vector.multi_reduction <add>, %27, %cst_11 [1, 2] : vector<1x8x256xf32> to vector<1xf32>
      %29 = vector.shape_cast %28 : vector<1xf32> to vector<1x1x1xf32>
      %30 = vector.extract %29[0, 0, 0] : f32 from vector<1x1x1xf32>
      %31 = vector.broadcast %30 : f32 to vector<1x1xf32>
      %cst_12 = arith.constant 7.62939453E-6 : f32
      %32 = vector.broadcast %cst_12 : f32 to vector<1x1xf32>
      %33 = arith.mulf %31, %32 : vector<1x1xf32>
      %34 = vector.shape_cast %33 : vector<1x1xf32> to vector<1x1x1xf32>
      %c0_13 = arith.constant 0 : index
      %c0_14 = arith.constant 0 : index
      %c0_15 = arith.constant 0 : index
      %35 = vector.load %arg4[%c0_13, %c0_14, %c0_15] : memref<1x1x1xf32, #tpu.memory_space<vmem>>, vector<1x1x1xf32>
      tpu.vector_store %arg4[%c0_13, %c0_14, %c0_15], %34 {strides = array<i32>} : memref<1x1x1xf32, #tpu.memory_space<vmem>>, vector<1x1x1xf32>,
    } else {
    }
    return
  }
  func.func @transform_0(%arg0: i32, %arg1: i32) -> (i32, i32) {
    %c2_i32 = arith.constant 2 : i32
    %0 = arith.muli %arg0, %c2_i32 : i32
    %1 = arith.addi %0, %arg1 : i32
    %c0_i32 = arith.constant 0 : i32
    %c0_i32_0 = arith.constant 0 : i32
    return %1, %c0_i32 : i32, i32
  }
  func.func @transform_1(%arg0: i32, %arg1: i32) -> (i32, i32) {
    %c0_i32 = arith.constant 0 : i32
    %c0_i32_0 = arith.constant 0 : i32
    %c0_i32_1 = arith.constant 0 : i32
    return %c0_i32, %c0_i32_0 : i32, i32
  }
  func.func @transform_2(%arg0: i32, %arg1: i32) -> (i32, i32, i32) {
    %c0_i32 = arith.constant 0 : i32
    %c0_i32_0 = arith.constant 0 : i32
    %c0_i32_1 = arith.constant 0 : i32
    return %arg0, %c0_i32, %c0_i32_0 : i32, i32, i32
  }
}

</mosaic_0001>

<llo_original>
// kernel: tpu_custom_call.1
$region0: #{tpu_custom_call.1}
  #allocation0 [shape = 'u32[]', space=smem, size = 0x4, offset = 0x4, fixed_abs, tag = 'smem constant byte address 0x4 - core index']
  #allocation1 [shape = 'u32[72,128]{1,0:T(1,128)}', space=vmem, size = 0x9000, scoped, tag = 'internal scratch']
  #allocation2 [shape = 'f32[8,256]{1,0:T(8,128)}', space=vmem, size = 0x2000, scoped, tag = 'scratch operand']
  %s0 = inlined_call_operand.hbm [shape: f32[256,256], index: 0, kind: input, shape index: {}]
  %s1 = inlined_call_operand.vmem [shape: f32[256,1], index: 1, kind: input, shape index: {}]
  %s2 = inlined_call_operand.vmem [shape: f32[2,1,1], index: 2, kind: output, shape index: {}]
  %s3 = sld [smem:[#allocation0]]
  $region53: #{tpu_custom_call.1} parent=0
    _
  %s5 = ssub.s32 1, %s3
  %s6 = scalar_select 0, %s5, %s3
  $region1: #{tpu_custom_call.1} parent=0
    #allocation3 [shape = 'u8[131072]{0}', space=vmem, size = 0x20000, scoped, tag = 'input window, operand 0']
    #allocation4 [shape = 's32[2]{0}', space=sflag, size = 0x8, scoped, tag = 'scoped memory for tpu_custom_call.1']
    %7 = vsyncpa [#allocation4], 0
    %s8 = scalar_lea.sflag [#allocation4], 1
    %9 = vsyncpa %s8, 0
    loop: start=0, step=1, limit=6
    $region2: #{tpu_custom_call.1} parent=1 // loop_pre_header
      _
    $region3: #{tpu_custom_call.1} parent=1 // loop_header
      %s11 = sphi 0, %s15
      %p12 = scmp.ge.s32.totalorder %s11, 6
      %s18 = sphi 0, %s30
      %s19 = sphi 0, %s26
      %s20 = sphi 0, %s18
      %s21 = sphi 0, %s19
      %s22 = sphi 0, %s20
      %s23 = sphi 0, %s21
      %s37 = sphi 0, %s39
      %s40 = sphi 0, %s37
      %s41 = sphi 0, %s40
      %s57 = sphi 0, %s41
      %s61 = sphi 0, %s61
      %s63 = sphi 0, %s61
      %s64 = sphi 0, %s63
      %s78 = sphi 0, %s64
      %s84 = sphi 0, %s86
      %s87 = sphi 0, %s84
      %s88 = sphi 0, %s87
      %s104 = sphi 0, %s88
    $region4: #{tpu_custom_call.1} parent=1 // loop_header_branch
      %14 = sbr.rel (%p12) target = $region8
    $region5: #{tpu_custom_call.1} parent=1 // loop_body
      %s16 = ssub.s32 %s11, 1
      %s17 = ssub.s32 %s11, 2
      %s24 = sadd.s32 1, %s19
      %p25 = scmp.ge.s32.totalorder %s24, 2
      %s26 = scalar_select %p25, 0, %s24
      %s27 = sadd.s32 1, %s18
      %s28 = scalar_select %p25, %s27, %s18
      %p29 = scmp.ge.s32.totalorder %s28, 2
      %s30 = scalar_select %p29, 0, %s28
      %s31 = smul.u32 %s18, 2
      %s32 = sadd.s32 %s31, %s19
      %s33 = smul.u32 %s30, 2
      %s34 = sadd.s32 %s33, %s26
      %s35 = ssub.s32 %s32, %s34
      %p36 = scmp.eq.s32.totalorder %s35, 0
      %s38 = sadd.s32 %s37, 1
      %s39 = scalar_select %p36, %s37, %s38
      %p42 = pneg %p36
      %p43 = scmp.eq.s32.totalorder %s11, 3
      %p44 = por %p42, %p43
      %p45 = scmp.ne.s32.totalorder %s37, %s40
      %p46 = scmp.eq.s32.totalorder %s11, 0
      %p47 = por %p45, %p46
      %p48 = scmp.ne.s32.totalorder %s37, %s40
      %p49 = scmp.eq.s32.totalorder %s16, 3
      %p50 = por %p48, %p49
      %p51 = scmp.ne.s32.totalorder %s40, %s41
      %p52 = scmp.eq.s32.totalorder %s16, 0
      %p53 = por %p51, %p52
      %p54 = scmp.ne.s32.totalorder %s40, %s41
      %p55 = scmp.eq.s32.totalorder %s17, 3
      %p56 = por %p54, %p55
      %p58 = scmp.ne.s32.totalorder %s41, %s57
      %p59 = scmp.eq.s32.totalorder %s17, 0
      %p60 = por %p58, %p59
      %s62 = sadd.s32 %s61, 1
      %p65 = scmp.eq.s32.totalorder %s11, 3
      %p66 = scmp.ne.s32.totalorder %s61, %s63
      %p67 = scmp.eq.s32.totalorder %s11, 0
      %p68 = por %p66, %p67
      %p69 = scmp.ne.s32.totalorder %s61, %s63
      %p70 = scmp.eq.s32.totalorder %s16, 3
      %p71 = por %p69, %p70
      %p72 = scmp.ne.s32.totalorder %s63, %s64
      %p73 = scmp.eq.s32.totalorder %s16, 0
      %p74 = por %p72, %p73
      %p75 = scmp.ne.s32.totalorder %s63, %s64
      %p76 = scmp.eq.s32.totalorder %s17, 3
      %p77 = por %p75, %p76
      %p79 = scmp.ne.s32.totalorder %s64, %s78
      %p80 = scmp.eq.s32.totalorder %s17, 0
      %p81 = por %p79, %p80
      %s82 = ssub.s32 %s18, %s30
      %p83 = scmp.eq.s32.totalorder %s82, 0
      %s85 = sadd.s32 %s84, 1
      %s86 = scalar_select %p83, %s84, %s85
      %p89 = pneg %p83
      %p90 = scmp.eq.s32.totalorder %s11, 3
      %p91 = por %p89, %p90
      %p92 = scmp.ne.s32.totalorder %s84, %s87
      %p93 = scmp.eq.s32.totalorder %s11, 0
      %p94 = por %p92, %p93
      %p95 = scmp.ne.s32.totalorder %s84, %s87
      %p96 = scmp.eq.s32.totalorder %s16, 3
      %p97 = por %p95, %p96
      %p98 = scmp.ne.s32.totalorder %s87, %s88
      %p99 = scmp.eq.s32.totalorder %s16, 0
      %p100 = por %p98, %p99
      %p101 = scmp.ne.s32.totalorder %s87, %s88
      %p102 = scmp.eq.s32.totalorder %s17, 3
      %p103 = por %p101, %p102
      %p105 = scmp.ne.s32.totalorder %s88, %s104
      %p106 = scmp.eq.s32.totalorder %s17, 0
      %p107 = por %p105, %p106
      %p108 = scmp.le.s32.totalorder 1, %s11
      %p109 = scmp.lt.s32.totalorder %s11, 5
      %p110 = pnand %p108, %p109
      %p111 = pneg %p110
      // Predicated region
      $region9: #{tpu_custom_call.1} parent=5 // pred_check
        _
      $region10: #{tpu_custom_call.1} parent=5 // pred_check_branch
        %113 = sbr.rel (%p110) target = $region12
      $region11: #{tpu_custom_call.1} parent=5 // pred_region
        %s114 = ssub.s32 %s11, 1
        // Predicated region
        $region13: #{tpu_custom_call.1} parent=11 // pred_check
          %p115 = pneg %p74
        $region14: #{tpu_custom_call.1} parent=11 // pred_check_branch
          %117 = sbr.rel (%p115) target = $region16
        $region15: #{tpu_custom_call.1} parent=11 // pred_region
          _
        $region16: #{tpu_custom_call.1} parent=11 // pred_fallthru
          _
      $region12: #{tpu_custom_call.1} parent=5 // pred_fallthru
        _
      %p118 = scmp.lt.s32.totalorder %s11, 4
      // Predicated region
      $region17: #{tpu_custom_call.1} parent=5 // pred_check
        %p119 = pneg %p118
      $region18: #{tpu_custom_call.1} parent=5 // pred_check_branch
        %121 = sbr.rel (%p119) target = $region20
      $region19: #{tpu_custom_call.1} parent=5 // pred_region
        // Predicated region
        $region21: #{tpu_custom_call.1} parent=19 // pred_check
          %p122 = pneg %p47
        $region22: #{tpu_custom_call.1} parent=19 // pred_check_branch
          %124 = sbr.rel (%p122) target = $region24
        $region23: #{tpu_custom_call.1} parent=19 // pred_region
          %s125 = sand.u32 %s37, 1
          %s126 = scalar_lea.sflag [#allocation4], %s125
          %s127 = sand.u32 %s37, 1
          %s128 = smul.addr %s127, 128
          %s129 = scalar_lea.vmem [#allocation3], %s128
          %s130 = smul.u32 %s18, 2
          %s131 = sadd.s32 %s130, %s19
          %s132 = smul.u32 8, %s131
          %134 = vsyncadd %s126, 0
          %s135 = smul.addr %s132, 2
          %s136 = smul.addr %s135, 8
          %s137 = scalar_lea.hbm %s0, %s136
          %s138 = sshll.u32 %s137, 4
          %s139 = int_to_ptr.hbm [resolvable:$true] %s138
          %s140 = sshll.u32 %s129, 4
          %s141 = int_to_ptr.vmem [resolvable:$true] %s140
          %146 = dma.hbm_to_vmem [thread:$0]  %s139, 2048, %s141, %s126, 256, 256, 16
        $region24: #{tpu_custom_call.1} parent=19 // pred_fallthru
          _
      $region20: #{tpu_custom_call.1} parent=5 // pred_fallthru
        _
      %p147 = scmp.le.s32.totalorder 1, %s11
      %p148 = scmp.lt.s32.totalorder %s11, 5
      %p149 = pnand %p147, %p148
      %p150 = pneg %p149
      // Predicated region
      $region25: #{tpu_custom_call.1} parent=5 // pred_check
        _
      $region26: #{tpu_custom_call.1} parent=5 // pred_check_branch
        %152 = sbr.rel (%p149) target = $region28
      $region27: #{tpu_custom_call.1} parent=5 // pred_region
        %s153 = ssub.s32 %s11, 1
        %s154 = sand.u32 %s40, 1
        %s155 = scalar_lea.sflag [#allocation4], %s154
        %s156 = sand.u32 %s40, 1
        %s157 = smul.addr %s156, 128
        %s158 = scalar_lea.vmem [#allocation3], %s157
        // Predicated region
        $region29: #{tpu_custom_call.1} parent=27 // pred_check
          %p159 = pneg %p53
        $region30: #{tpu_custom_call.1} parent=27 // pred_check_branch
          %161 = sbr.rel (%p159) target = $region32
        $region31: #{tpu_custom_call.1} parent=27 // pred_region
          %163 = dma.done %s155, 2048
        $region32: #{tpu_custom_call.1} parent=27 // pred_fallthru
          _
        %s164 = sand.u32 %s40, 1
        %s165 = scalar_lea.sflag [#allocation4], %s164
        %s166 = sand.u32 %s40, 1
        %s167 = smul.addr %s166, 128
        %s168 = scalar_lea.vmem [#allocation3], %s167
        %p169 = pneg %p53
        %p170 = pneg %p50
        %p171 = pneg %p74
        %p172 = pneg %p71
        %p173 = pneg %p100
        %p174 = pneg %p97
        %p175 = scmp.lt.s32.totalorder %s20, 1
        %s176 = scalar_select %p175, %s20, 1
        %s177 = scalar_lea.vmem %s2, %s176
        %s178 = smul.u32 %s20, 2
        %s179 = sadd.s32 %s178, %s21
        %s180 = smul.u32 8, %s179
        %p181 = scmp.lt.s32.totalorder %s20, 1
        %s182 = scalar_select %p181, %s20, 1
        %s183 = scalar_lea.vmem %s2, %s182
        %p184 = scmp.eq.s32.totalorder %s21, 0
        // Predicated region
        $region33: #{tpu_custom_call.1} parent=27 // pred_check
          %p185 = pneg %p184
        $region34: #{tpu_custom_call.1} parent=27 // pred_check_branch
          %187 = sbr.rel (%p185) target = $region36
        $region35: #{tpu_custom_call.1} parent=27 // pred_region
          %188 = vst [vmem:[#allocation2] sm:$0xff] 0.0
          %189 = vst [vmem:[#allocation2 + $0x8] sm:$0xff] 0.0
        $region36: #{tpu_custom_call.1} parent=27 // pred_fallthru
          _
        %v190 = vld [vmem:[%s158] sm:$0xff]
        %v191 = vld [vmem:[%s158 + $0x8] sm:$0xff]
        %v192 = vld [vmem:[%s158 + $0x10] sm:$0xff]
        %v193 = vld [vmem:[%s158 + $0x18] sm:$0xff]
        %v194 = vld [vmem:[%s158 + $0x20] sm:$0xff]
        %v195 = vld [vmem:[%s158 + $0x28] sm:$0xff]
        %v196 = vld [vmem:[%s158 + $0x30] sm:$0xff]
        %v197 = vld [vmem:[%s158 + $0x38] sm:$0xff]
        %v198 = vld [vmem:[%s158 + $0x40] sm:$0xff]
        %v199 = vld [vmem:[%s158 + $0x48] sm:$0xff]
        %v200 = vld [vmem:[%s158 + $0x50] sm:$0xff]
        %v201 = vld [vmem:[%s158 + $0x58] sm:$0xff]
        %v202 = vld [vmem:[%s158 + $0x60] sm:$0xff]
        %v203 = vld [vmem:[%s158 + $0x68] sm:$0xff]
        %v204 = vld [vmem:[%s158 + $0x70] sm:$0xff]
        %v205 = vld [vmem:[%s158 + $0x78] sm:$0xff]
        %s206 = smul.u32 %s20, 2
        %s207 = sadd.s32 %s206, %s21
        %s208 = smul.u32 %s207, 64
        %s209 = scalar_lea.vmem %s1, %s208
        %v210 = vld [vmem:[%s209] sm:$0xff]
        %v211 = vld [vmem:[%s209 + $0x8] sm:$0xff]
        %v212 = vld [vmem:[%s209 + $0x10] sm:$0xff]
        %v213 = vld [vmem:[%s209 + $0x18] sm:$0xff]
        %v214 = vld [vmem:[%s209 + $0x20] sm:$0xff]
        %v215 = vld [vmem:[%s209 + $0x28] sm:$0xff]
        %v216 = vld [vmem:[%s209 + $0x30] sm:$0xff]
        %v217 = vld [vmem:[%s209 + $0x38] sm:$0xff]
        %v218 = vmul.f32 %v190, 0.5
        %v219 = vmul.f32 %v191, 0.5
        %v220 = vmul.f32 %v192, 0.5
        %v221 = vmul.f32 %v193, 0.5
        %v222 = vmul.f32 %v194, 0.5
        %v223 = vmul.f32 %v195, 0.5
        %v224 = vmul.f32 %v196, 0.5
        %v225 = vmul.f32 %v197, 0.5
        %v226 = vmul.f32 %v198, 0.5
        %v227 = vmul.f32 %v199, 0.5
        %v228 = vmul.f32 %v200, 0.5
        %v229 = vmul.f32 %v201, 0.5
        %v230 = vmul.f32 %v202, 0.5
        %v231 = vmul.f32 %v203, 0.5
        %v232 = vmul.f32 %v204, 0.5
        %v233 = vmul.f32 %v205, 0.5
        %235 = vset.pattern.permute.xlu0 0
        %236 = vperm.xlu0 %235, %v210
        %v237 = vpop.permute.xlu0 %236
        %240 = vset.pattern.permute.xlu0 0
        %241 = vperm.xlu0 %240, %v211
        %v242 = vpop.permute.xlu0 %241
        %245 = vset.pattern.permute.xlu0 0
        %246 = vperm.xlu0 %245, %v212
        %v247 = vpop.permute.xlu0 %246
        %250 = vset.pattern.permute.xlu0 0
        %251 = vperm.xlu0 %250, %v213
        %v252 = vpop.permute.xlu0 %251
        %255 = vset.pattern.permute.xlu0 0
        %256 = vperm.xlu0 %255, %v214
        %v257 = vpop.permute.xlu0 %256
        %260 = vset.pattern.permute.xlu0 0
        %261 = vperm.xlu0 %260, %v215
        %v262 = vpop.permute.xlu0 %261
        %265 = vset.pattern.permute.xlu0 0
        %266 = vperm.xlu0 %265, %v216
        %v267 = vpop.permute.xlu0 %266
        %270 = vset.pattern.permute.xlu0 0
        %271 = vperm.xlu0 %270, %v217
        %v272 = vpop.permute.xlu0 %271
        %v274 = vsub.f32 %v218, %v237
        %v275 = vsub.f32 %v219, %v237
        %v276 = vsub.f32 %v220, %v242
        %v277 = vsub.f32 %v221, %v242
        %v278 = vsub.f32 %v222, %v247
        %v279 = vsub.f32 %v223, %v247
        %v280 = vsub.f32 %v224, %v252
        %v281 = vsub.f32 %v225, %v252
        %v282 = vsub.f32 %v226, %v257
        %v283 = vsub.f32 %v227, %v257
        %v284 = vsub.f32 %v228, %v262
        %v285 = vsub.f32 %v229, %v262
        %v286 = vsub.f32 %v230, %v267
        %v287 = vsub.f32 %v231, %v267
        %v288 = vsub.f32 %v232, %v272
        %v289 = vsub.f32 %v233, %v272
        %v290 = vtanh.pop %v274
        %v291 = vtanh.pop %v275
        %v292 = vtanh.pop %v276
        %v293 = vtanh.pop %v277
        %v294 = vtanh.pop %v278
        %v295 = vtanh.pop %v279
        %v296 = vtanh.pop %v280
        %v297 = vtanh.pop %v281
        %v298 = vtanh.pop %v282
        %v299 = vtanh.pop %v283
        %v300 = vtanh.pop %v284
        %v301 = vtanh.pop %v285
        %v302 = vtanh.pop %v286
        %v303 = vtanh.pop %v287
        %v304 = vtanh.pop %v288
        %v305 = vtanh.pop %v289
        %v306 = vmul.f32 %v218, %v190
        %v307 = vmul.f32 %v219, %v191
        %v308 = vmul.f32 %v220, %v192
        %v309 = vmul.f32 %v221, %v193
        %v310 = vmul.f32 %v222, %v194
        %v311 = vmul.f32 %v223, %v195
        %v312 = vmul.f32 %v224, %v196
        %v313 = vmul.f32 %v225, %v197
        %v314 = vmul.f32 %v226, %v198
        %v315 = vmul.f32 %v227, %v199
        %v316 = vmul.f32 %v228, %v200
        %v317 = vmul.f32 %v229, %v201
        %v318 = vmul.f32 %v230, %v202
        %v319 = vmul.f32 %v231, %v203
        %v320 = vmul.f32 %v232, %v204
        %v321 = vmul.f32 %v233, %v205
        %v322 = vtanh.pop %v306
        %v323 = vtanh.pop %v307
        %v324 = vtanh.pop %v308
        %v325 = vtanh.pop %v309
        %v326 = vtanh.pop %v310
        %v327 = vtanh.pop %v311
        %v328 = vtanh.pop %v312
        %v329 = vtanh.pop %v313
        %v330 = vtanh.pop %v314
        %v331 = vtanh.pop %v315
        %v332 = vtanh.pop %v316
        %v333 = vtanh.pop %v317
        %v334 = vtanh.pop %v318
        %v335 = vtanh.pop %v319
        %v336 = vtanh.pop %v320
        %v337 = vtanh.pop %v321
        %v338 = vadd.f32 %v290, %v322
        %v339 = vadd.f32 %v291, %v323
        %v340 = vadd.f32 %v292, %v324
        %v341 = vadd.f32 %v293, %v325
        %v342 = vadd.f32 %v294, %v326
        %v343 = vadd.f32 %v295, %v327
        %v344 = vadd.f32 %v296, %v328
        %v345 = vadd.f32 %v297, %v329
        %v346 = vadd.f32 %v298, %v330
        %v347 = vadd.f32 %v299, %v331
        %v348 = vadd.f32 %v300, %v332
        %v349 = vadd.f32 %v301, %v333
        %v350 = vadd.f32 %v302, %v334
        %v351 = vadd.f32 %v303, %v335
        %v352 = vadd.f32 %v304, %v336
        %v353 = vadd.f32 %v305, %v337
        %v354 = vld [vmem:[#allocation2] sm:$0xff]
        %v355 = vld [vmem:[#allocation2 + $0x8] sm:$0xff]
        %v356 = vadd.f32 %v338, %v340
        %v357 = vadd.f32 %v356, %v342
        %v358 = vadd.f32 %v357, %v344
        %v359 = vadd.f32 %v358, %v346
        %v360 = vadd.f32 %v359, %v348
        %v361 = vadd.f32 %v360, %v350
        %v362 = vadd.f32 %v361, %v352
        %v363 = vadd.f32 %v339, %v341
        %v364 = vadd.f32 %v363, %v343
        %v365 = vadd.f32 %v364, %v345
        %v366 = vadd.f32 %v365, %v347
        %v367 = vadd.f32 %v366, %v349
        %v368 = vadd.f32 %v367, %v351
        %v369 = vadd.f32 %v368, %v353
        %v370 = vadd.f32 %v354, %v362
        %v371 = vadd.f32 %v355, %v369
        %372 = vst [vmem:[#allocation2] sm:$0xff] %v370
        %373 = vst [vmem:[#allocation2 + $0x8] sm:$0xff] %v371
        %p374 = scmp.eq.s32.totalorder %s21, 1
        // Predicated region
        $region37: #{tpu_custom_call.1} parent=27 // pred_check
          %p375 = pneg %p374
        $region38: #{tpu_custom_call.1} parent=27 // pred_check_branch
          %377 = sbr.rel (%p375) target = $region40
        $region39: #{tpu_custom_call.1} parent=27 // pred_region
          %v378 = vld [vmem:[#allocation2] sm:$0xff]
          %v379 = vld [vmem:[#allocation2 + $0x8] sm:$0xff]
          %v380 = vadd.f32 %v378, %v379
          %381 = vadd.xlane.f32.xlu0 %v380
          %v382 = vpop.xlane.xlu0 %381
          %v383 = vrot.slane %v382, 4
          %v384 = vadd.f32 %v382, %v383
          %v385 = vrot.slane %v384, 2
          %v386 = vadd.f32 %v384, %v385
          %v387 = vrot.slane %v386, 1
          %v388 = vadd.f32 %v386, %v387
          %s389 = vtos %v388
          %v390 = vstv %s389
          %v391 = vmul.f32 %v390, 7.6293945e-06
          %vm392 = vcmask 0
          %393 = vst.msk [vmem:[%s183] sm:$0x1] %vm392, %v391
        $region40: #{tpu_custom_call.1} parent=27 // pred_fallthru
          _
        %p394 = scmp.lt.s32.totalorder %s20, 1
        %s395 = scalar_select %p394, %s20, 1
        %s396 = scalar_lea.vmem %s2, %s395
        // Predicated region
        $region41: #{tpu_custom_call.1} parent=27 // pred_check
          %p397 = pneg %p97
        $region42: #{tpu_custom_call.1} parent=27 // pred_check_branch
          %399 = sbr.rel (%p397) target = $region44
        $region43: #{tpu_custom_call.1} parent=27 // pred_region
          _
        $region44: #{tpu_custom_call.1} parent=27 // pred_fallthru
          _
      $region28: #{tpu_custom_call.1} parent=5 // pred_fallthru
        _
      %p400 = scmp.le.s32.totalorder 2, %s11
      // Predicated region
      $region45: #{tpu_custom_call.1} parent=5 // pred_check
        %p401 = pneg %p400
      $region46: #{tpu_custom_call.1} parent=5 // pred_check_branch
        %403 = sbr.rel (%p401) target = $region48
      $region47: #{tpu_custom_call.1} parent=5 // pred_region
        %s404 = ssub.s32 %s11, 2
        // Predicated region
        $region49: #{tpu_custom_call.1} parent=47 // pred_check
          %p405 = pneg %p103
        $region50: #{tpu_custom_call.1} parent=47 // pred_check_branch
          %407 = sbr.rel (%p405) target = $region52
        $region51: #{tpu_custom_call.1} parent=47 // pred_region
          %p408 = scmp.lt.s32.totalorder %s22, 1
          %s409 = scalar_select %p408, %s22, 1
          %s410 = scalar_lea.vmem %s2, %s409
        $region52: #{tpu_custom_call.1} parent=47 // pred_fallthru
          _
      $region48: #{tpu_custom_call.1} parent=5 // pred_fallthru
        _
    $region6: #{tpu_custom_call.1} parent=1 // loop_footer
      %s15 = sadd.s32 1, %s11
    $region7: #{tpu_custom_call.1} parent=1 // loop_footer_branch
      %10 = sbr.rel target = $region3
    $region8: #{tpu_custom_call.1} parent=1 // loop_exit
      _
    %411 = vsyncpa [#allocation4], 1
    %s412 = scalar_lea.sflag [#allocation4], 1
    %413 = vsyncpa %s412, 1

</llo_original>
